<compile_context>
chip_gen: v6e
topology: v6e:2x2x1
jax: 0.10.0
libtpu: 0.0.40
codegen_flags: <defaults>
</compile_context>

<pallas_src>
import functools

import jax
import jax.numpy as jnp
from jax import lax
from jax.experimental import pallas as pl
from jax.experimental.pallas import tpu as pltpu


def _round_up(x, m):
    return ((x + m - 1) // m) * m


def _sublane_multiple(dtype):
    # (8,128) tile for 32-bit, (16,128) for bf16, (32,128) for int8/fp8.
    return max(8, 32 // jnp.dtype(dtype).itemsize)


def _vmem_capacity_bytes():
    try:
        return int(pltpu.get_tpu_info().vmem_capacity_bytes)
    except Exception:
        return 64 << 20  # conservative: v7x per-TensorCore VMEM


def _num_tensorcores():
    # v7x exposes 2 TensorCores per chip sharing the "parallel" grid axis;
    # v5e/v6e have 1. Fall back to 1 if detection fails (correct, maybe slower).
    try:
        kind = jax.devices()[0].device_kind.lower()
        if "v7" in kind:
            return 2
    except Exception:
        pass
    return 1


def _feature_fusion_kernel(news_ref, ids_ref, tbl_ref, out_ref, *, num_categories):
    news = news_ref[...]          # [R, D_news]
    ids = ids_ref[...]            # [R, 2] int32 (col 0 = category, col 1 = subCategory)
    tbl = tbl_ref[...]            # [C+S, D_cat+D_sub] block-diagonal combined table

    R = news.shape[0]
    D_news = news.shape[1]
    V = tbl.shape[0]

    cat_ids = ids[:, 0:1]                       # [R, 1]
    sub_ids = ids[:, 1:2] + num_categories      # [R, 1], offset into combined table

    # Fused embedding gather: one two-hot x block-diagonal table MXU matmul
    # (vocabularies are tiny and the MXU is otherwise idle). Hits at cat_id and
    # C + sub_id never overlap, so OR builds an exact two-hot matrix.
    pos = lax.broadcasted_iota(jnp.int32, (R, V), 1)
    twohot = ((pos == cat_ids) | (pos == sub_ids)).astype(tbl.dtype)
    emb = jnp.dot(twohot, tbl, preferred_element_type=jnp.float32)   # [R, D_cat+D_sub]

    # Two slice stores: news pass-through + one contiguous combined-embedding
    # store (no lane-axis concatenate, no zero-fill of pad lanes).
    out_ref[:, :D_news] = news
    out_ref[:, D_news:] = emb.astype(out_ref.dtype)

    # TODO(synk): nn.Dropout is identity in eval mode; training-mode masking/scaling not implemented.


def feature_fusion(news_repr, category, subCategory, cat_emb, sub_emb, *, block_rows=4096):
    """news_repr: [B, T, D_news]; category/subCategory: [B, T] integer ids.

    Returns [B, T, D_news + D_cat + D_sub]
            == torch.cat([news, cat_emb(c), sub_emb(s)], dim=2) (dropout = identity).
    """
    B, T, D_news = news_repr.shape
    C, D_cat = cat_emb.shape
    S, D_sub = sub_emb.shape
    D_emb = D_cat + D_sub
    D_out = D_news + D_emb
    N = B * T

    dtype = news_repr.dtype
    itemsize = jnp.dtype(dtype).itemsize
    sub_mult = _sublane_multiple(dtype)
    num_cores = _num_tensorcores()
    vmem_cap = _vmem_capacity_bytes()

    # Block-diagonal combined embedding table (cat rows top-left, sub rows
    # bottom-right) so a single two-hot matmul gathers both embeddings.
    tbl = jnp.zeros((C + S, D_emb), jnp.float32)
    tbl = tbl.at[:C, :D_cat].set(cat_emb.astype(jnp.float32))
    tbl = tbl.at[C:, D_cat:].set(sub_emb.astype(jnp.float32))

    news_flat = news_repr.reshape(N, D_news)
    ids = jnp.stack(
        [category.reshape(N).astype(jnp.int32),
         subCategory.reshape(N).astype(jnp.int32)], axis=1)            # [N, 2]

    # ---- row-block selection: as big as the VMEM budget allows (mem-bound) ----
    bytes_per_row = (D_news + D_out) * itemsize + 2 * 4
    budget = max(vmem_cap // 3, 4 << 20)                # headroom for scratch/regalloc
    max_rows = max(sub_mult, budget // (2 * bytes_per_row))   # x2: double-buffered
    block_rows = max(sub_mult, min(int(block_rows), int(max_rows)))
    block_rows = max(sub_mult, (block_rows // sub_mult) * sub_mult)

    if N <= block_rows:
        # Small problem: one block on 1-TC chips (v5e/v6e: a second grid step is
        # pure overhead); split across the 2 TensorCores on v7x.
        block_rows = max(sub_mult, _round_up(pl.cdiv(N, num_cores), sub_mult))

    grid = pl.cdiv(N, block_rows)
    if num_cores > 1 and grid > 1 and grid % num_cores != 0:
        # Keep the "parallel" grid axis a multiple of the TC count (v7x megacore).
        grid_t = _round_up(grid, num_cores)
        block_rows = max(sub_mult, _round_up(pl.cdiv(N, grid_t), sub_mult))
        grid = pl.cdiv(N, block_rows)

    # Explicit VMEM limit only when the double-buffered footprint exceeds the
    # smallest scoped default (16 MiB on v5e); clamp to physical capacity.
    tbl_bytes = tbl.size * 4
    needed_vmem = (2 * block_rows * (D_news + D_out) * itemsize
                   + 2 * block_rows * 2 * 4
                   + 2 * tbl_bytes
                   + (2 << 20))
    vmem_limit = int(min(needed_vmem, vmem_cap)) if needed_vmem > (16 << 20) else None

    cost = pl.CostEstimate(
        flops=2 * N * (C + S) * D_emb,
        transcendentals=0,
        bytes_accessed=(N * D_news * itemsize      # news read
                        + N * D_out * itemsize     # output write (unpadded)
                        + N * 2 * 4                # packed ids
                        + tbl_bytes),              # combined table (once)
    )

    kernel = functools.partial(_feature_fusion_kernel, num_categories=C)

    out_flat = pl.pallas_call(
        kernel,
        out_shape=jax.ShapeDtypeStruct((N, D_out), dtype),
        grid_spec=pltpu.PrefetchScalarGridSpec(
            num_scalar_prefetch=0,
            grid=(grid,),
            in_specs=[
                pl.BlockSpec((block_rows, D_news), lambda i: (i, 0)),
                pl.BlockSpec((block_rows, 2), lambda i: (i, 0)),
                pl.BlockSpec(tbl.shape, lambda i: (0, 0)),   # constant index: no re-DMA per step
            ],
            out_specs=pl.BlockSpec((block_rows, D_out), lambda i: (i, 0)),
        ),
        compiler_params=pltpu.CompilerParams(
            dimension_semantics=("parallel",),
            vmem_limit_bytes=vmem_limit,
        ),
        cost_estimate=cost,
    )(news_flat, ids, tbl)

    return out_flat.reshape(B, T, D_out)


if __name__ == "__main__":
    # Small config consistent with the module's __init__:
    #   category_num=10, category_embedding_dim=16
    #   subCategory_num=12, subCategory_embedding_dim=8
    #   news_representation dim (from subclass encoder) = 32
    category_num, D_cat = 10, 16
    subCategory_num, D_sub = 12, 8
    D_news = 32

    key = jax.random.PRNGKey(0)
    k1, k2, k3, _, _ = jax.random.split(key, 5)

    # Deterministic parameter init mirroring NewsEncoder.initialize():
    #   uniform(-0.1, 0.1) for both embeddings, subCategory row 0 zeroed.
    cat_emb = jax.random.uniform(k1, (category_num, D_cat), jnp.float32, -0.1, 0.1)
    sub_emb = jax.random.uniform(k2, (subCategory_num, D_sub), jnp.float32, -0.1, 0.1)
    sub_emb = sub_emb.at[0].set(0.0)

    ok = True
    # (2, 8): block-aligned rows; (3, 5) and (4, 11): exercise the ragged-last-block path.
    for (B, T) in [(2, 8), (3, 5), (4, 11)]:
        kk3, kk4, kk5 = jax.random.split(jax.random.fold_in(k3, B * 100 + T), 3)
        news_repr = jax.random.normal(kk3, (B, T, D_news), jnp.float32)
        category = jax.random.randint(kk4, (B, T), 0, category_num, jnp.int32)
        subCategory = jax.random.randint(kk5, (B, T), 0, subCategory_num, jnp.int32)

        out = feature_fusion(news_repr, category, subCategory, cat_emb, sub_emb)
        out = jax.block_until_ready(out)

        # Pure-JAX reference (torch.cat([news, cat_emb(c), sub_emb(s)], dim=2), dropout=identity).
        ref = jnp.concatenate([news_repr, cat_emb[category], sub_emb[subCategory]], axis=2)

        ok &= out.shape == (B, T, D_news + D_cat + D_sub)
        ok &= bool(jnp.allclose(out, ref, atol=1e-6))

    assert ok, "mismatch vs reference"
    print("KERNEL_OK")
</pallas_src>

<mosaic_0001>
module attributes {stable_mosaic.version = 11 : i64} {
  func.func @_feature_fusion_kernel(%arg0: i32, %arg1: memref<16x32xf32, #tpu.memory_space<vmem>>, %arg2: memref<16x2xi32, #tpu.memory_space<vmem>>, %arg3: memref<22x24xf32, #tpu.memory_space<vmem>>, %arg4: memref<16x56xf32, #tpu.memory_space<vmem>>) attributes {dimension_semantics = [#tpu.dimension_semantics<parallel>], iteration_bounds = array<i64: 1>, scalar_prefetch = 0 : i64, scratch_operands = 0 : i64, tpu.core_type = #tpu.core_type<tc>, window_params = [{transform_indices = @transform_0, window_bounds = array<i64: 16, 32>}, {transform_indices = @transform_1, window_bounds = array<i64: 16, 2>}, {pipeline_mode = #tpu.pipeline_mode<synchronous>, transform_indices = @transform_2, window_bounds = array<i64: 22, 24>}, {transform_indices = @transform_3, window_bounds = array<i64: 16, 56>}]} {
    %c0 = arith.constant 0 : index
    %c0_0 = arith.constant 0 : index
    %0 = vector.load %arg1[%c0, %c0_0] : memref<16x32xf32, #tpu.memory_space<vmem>>, vector<16x32xf32>
    %c0_1 = arith.constant 0 : index
    %c0_2 = arith.constant 0 : index
    %1 = vector.load %arg2[%c0_1, %c0_2] : memref<16x2xi32, #tpu.memory_space<vmem>>, vector<16x2xi32>
    %c0_3 = arith.constant 0 : index
    %c0_4 = arith.constant 0 : index
    %2 = vector.load %arg3[%c0_3, %c0_4] : memref<22x24xf32, #tpu.memory_space<vmem>>, vector<22x24xf32>
    %3 = vector.extract_strided_slice %1 {offsets = [0, 0], sizes = [16, 1], strides = [1, 1]} : vector<16x2xi32> to vector<16x1xi32>
    %4 = vector.extract_strided_slice %1 {offsets = [0, 1], sizes = [16, 1], strides = [1, 1]} : vector<16x2xi32> to vector<16x1xi32>
    %c10_i32 = arith.constant 10 : i32
    %5 = vector.broadcast %c10_i32 : i32 to vector<16x1xi32>
    %6 = arith.addi %4, %5 : vector<16x1xi32>
    %7 = tpu.iota {dimensions = array<i32: 1>} : vector<16x22xi32>
    %8 = vector.broadcast %3 : vector<16x1xi32> to vector<16x22xi32>
    %9 = arith.cmpi eq, %7, %8 : vector<16x22xi32>
    %10 = vector.broadcast %6 : vector<16x1xi32> to vector<16x22xi32>
    %11 = arith.cmpi eq, %7, %10 : vector<16x22xi32>
    %12 = arith.ori %9, %11 : vector<16x22xi1>
    %13 = arith.extui %12 : vector<16x22xi1> to vector<16x22xi32>
    %14 = arith.sitofp %13 : vector<16x22xi32> to vector<16x22xf32>
    %cst = arith.constant dense<0.000000e+00> : vector<16x24xf32>
    %15 = tpu.matmul %14, %2, %cst {dimension_numbers = #tpu.dot_dimension_numbers<[1], [0], [0], [1], [0, 0, 1, 1], [], []>} : vector<16x22xf32>, vector<22x24xf32>, vector<16x24xf32> -> vector<16x24xf32>
    %c0_5 = arith.constant 0 : index
    %c0_6 = arith.constant 0 : index
    %16 = vector.load %arg4[%c0_5, %c0_6] : memref<16x56xf32, #tpu.memory_space<vmem>>, vector<16x32xf32>
    tpu.vector_store %arg4[%c0_5, %c0_6], %0 {strides = array<i32>} : memref<16x56xf32, #tpu.memory_space<vmem>>, vector<16x32xf32>,
    %c0_7 = arith.constant 0 : index
    %c32 = arith.constant 32 : index
    %17 = vector.load %arg4[%c0_7, %c32] : memref<16x56xf32, #tpu.memory_space<vmem>>, vector<16x24xf32>
    tpu.vector_store %arg4[%c0_7, %c32], %15 {strides = array<i32>} : memref<16x56xf32, #tpu.memory_space<vmem>>, vector<16x24xf32>,
    return
  }
  func.func @transform_0(%arg0: i32) -> (i32, i32) {
    %c0_i32 = arith.constant 0 : i32
    %c0_i32_0 = arith.constant 0 : i32
    return %arg0, %c0_i32 : i32, i32
  }
  func.func @transform_1(%arg0: i32) -> (i32, i32) {
    %c0_i32 = arith.constant 0 : i32
    %c0_i32_0 = arith.constant 0 : i32
    return %arg0, %c0_i32 : i32, i32
  }
  func.func @transform_2(%arg0: i32) -> (i32, i32) {
    %c0_i32 = arith.constant 0 : i32
    %c0_i32_0 = arith.constant 0 : i32
    %c0_i32_1 = arith.constant 0 : i32
    return %c0_i32, %c0_i32_0 : i32, i32
  }
  func.func @transform_3(%arg0: i32) -> (i32, i32) {
    %c0_i32 = arith.constant 0 : i32
    %c0_i32_0 = arith.constant 0 : i32
    return %arg0, %c0_i32 : i32, i32
  }
}

</mosaic_0001>

<llo_original>
// kernel: tpu_custom_call.1
$region0: #{tpu_custom_call.1}
  #allocation0 [shape = 'u32[]', space=smem, size = 0x4, offset = 0x4, fixed_abs, tag = 'smem constant byte address 0x4 - core index']
  #allocation1 [shape = 'u32[144,128]{1,0:T(1,128)}', space=vmem, size = 0x12000, scoped, tag = 'internal scratch']
  %s0 = inlined_call_operand.vmem [shape: f32[16,32], index: 0, kind: input, shape index: {}]
  %s1 = inlined_call_operand.vmem [shape: s32[16,2], index: 1, kind: input, shape index: {}]
  %s2 = inlined_call_operand.hbm [shape: f32[22,24], index: 2, kind: input, shape index: {}]
  %s3 = inlined_call_operand.hbm [shape: f32[16,56], index: 3, kind: output, shape index: {}]
  %s4 = sld [smem:[#allocation0]]
  $region26: #{tpu_custom_call.1} parent=0
    _
  %s6 = ssub.s32 1, %s4
  %s7 = scalar_select 0, %s6, %s4
  $region1: #{tpu_custom_call.1} parent=0
    #allocation2 [shape = 'u8[12288]{0}', space=vmem, size = 0x3000, scoped, tag = 'input window, operand 2, single buffered']
    #allocation3 [shape = 's32[1]{0}', space=sflag, size = 0x4, scoped, tag = 'scoped memory for tpu_custom_call.1']
    #allocation4 [shape = 's32[1]{0}', space=sflag, size = 0x4, scoped, tag = 'scoped memory for tpu_custom_call.1']
    #allocation5 [shape = 'u8[8192]{0}', space=vmem, size = 0x2000, scoped, tag = 'output window, operand 0, single buffered']
    %8 = vsyncpa [#allocation3], 0
    %9 = vsyncpa [#allocation4], 0
    // Predicated region
    $region2: #{tpu_custom_call.1} parent=1 // pred_check
      _
    $region3: #{tpu_custom_call.1} parent=1 // pred_check_branch
      %11 = sbr.rel (0) target = $region5
    $region4: #{tpu_custom_call.1} parent=1 // pred_region
      _
    $region5: #{tpu_custom_call.1} parent=1 // pred_fallthru
      _
    // Predicated region
    $region6: #{tpu_custom_call.1} parent=1 // pred_check
      _
    $region7: #{tpu_custom_call.1} parent=1 // pred_check_branch
      %13 = sbr.rel (0) target = $region9
    $region8: #{tpu_custom_call.1} parent=1 // pred_region
      _
    $region9: #{tpu_custom_call.1} parent=1 // pred_fallthru
      _
    // Predicated region
    $region10: #{tpu_custom_call.1} parent=1 // pred_check
      _
    $region11: #{tpu_custom_call.1} parent=1 // pred_check_branch
      %15 = sbr.rel (0) target = $region13
    $region12: #{tpu_custom_call.1} parent=1 // pred_region
      %s17 = ssub.s32 384, 384
      %18 = vsyncadd [#allocation3], %s17
      %s19 = sshll.u32 [#allocation2], 4
      %s20 = int_to_ptr.vmem [resolvable:$true] %s19
      %25 = dma.hbm_to_vmem [thread:$0]  %s2, 384, %s20, [#allocation3], 128, 128, 8
    $region13: #{tpu_custom_call.1} parent=1 // pred_fallthru
      _
    // Predicated region
    $region14: #{tpu_custom_call.1} parent=1 // pred_check
      _
    $region15: #{tpu_custom_call.1} parent=1 // pred_check_branch
      %27 = sbr.rel (0) target = $region17
    $region16: #{tpu_custom_call.1} parent=1 // pred_region
      %28 = dma.done [#allocation3], 384
    $region17: #{tpu_custom_call.1} parent=1 // pred_fallthru
      _
    %v29 = vld [vmem:[%s0] sm:$0xff]
    %v30 = vld [vmem:[%s0 + $0x8] sm:$0xff]
    %v31 = vld [vmem:[%s1] sm:$0xff]
    %v32 = vld [vmem:[%s1 + $0x8] sm:$0xff]
    %v33 = vld [vmem:[#allocation2] sm:$0xff]
    %v34 = vld [vmem:[#allocation2 + $0x8] sm:$0xff]
    %v35 = vld [vmem:[#allocation2 + $0x10] sm:$0x3f]
    %v36 = vadd.s32 %v31, 10
    %v37 = vadd.s32 %v32, 10
    %v38 = vlaneseq
    %v39 = vand.u32 %v38, 127
    %40 = vset.pattern.permute.xlu0 0
    %41 = vperm.xlu0 %40, %v31
    %v42 = vpop.permute.xlu0 %41
    %43 = vset.pattern.permute.xlu0 0
    %44 = vperm.xlu0 %43, %v32
    %v45 = vpop.permute.xlu0 %44
    %vm46 = vcmp.eq.s32.totalorder %v39, %v42
    %vm47 = vcmp.eq.s32.totalorder %v39, %v45
    %48 = vset.pattern.permute.xlu0 1
    %49 = vperm.xlu0 %48, %v36
    %v50 = vpop.permute.xlu0 %49
    %51 = vset.pattern.permute.xlu0 1
    %52 = vperm.xlu0 %51, %v37
    %v53 = vpop.permute.xlu0 %52
    %vm54 = vcmp.eq.s32.totalorder %v39, %v50
    %vm55 = vcmp.eq.s32.totalorder %v39, %v53
    %vm56 = vmor %vm46, %vm54
    %vm57 = vmor %vm47, %vm55
    %v58 = vsel %vm56, 1, 0
    %v59 = vsel %vm57, 1, 0
    %v60 = vcvt.s32.f32 %v58
    %v61 = vcvt.s32.f32 %v59
    %vm62 = vcmask 179200
    %v64 = vsel %vm62, %v60, 0
    %v67 = vsel %vm62, %v61, 0
    %vm69 = vcmask 1045504
    %v71 = vsel %vm69, %v35, 0
    %73 = vmatprep.subr.mxu0 0.0
    %74 = vmatpush1.msra.mxu0 0.0
    %75 = vmatprep.subr.mxu0 0.0
    %76 = vmatpush1.msra.mxu0 0.0
    %77 = vmatprep.subr.mxu0 0.0
    %78 = vmatpush1.msra.mxu0 0.0
    %79 = vmatprep.subr.mxu0 0.0
    %80 = vmatpush1.msra.mxu0 0.0
    %81 = vmatprep.subr.mxu0 0.0
    %82 = vmatpush1.msra.mxu0 0.0
    %83 = vmatprep.subr.mxu0 0.0
    %84 = vmatpush1.msra.mxu0 0.0
    %85 = vmatprep.subr.mxu0 0.0
    %86 = vmatpush1.msra.mxu0 0.0
    %87 = vmatprep.subr.mxu0 0.0
    %88 = vmatpush1.msra.mxu0 0.0
    %89 = vmatprep.subr.mxu0 0.0
    %90 = vmatpush1.msra.mxu0 0.0
    %91 = vmatprep.subr.mxu0 0.0
    %92 = vmatpush1.msra.mxu0 0.0
    %93 = vmatprep.subr.mxu0 0.0
    %94 = vmatpush1.msra.mxu0 0.0
    %95 = vmatprep.subr.mxu0 0.0
    %96 = vmatpush1.msra.mxu0 0.0
    %97 = vmatprep.subr.mxu0 0.0
    %98 = vmatpush1.msra.mxu0 0.0
    %99 = vmatprep.subr.mxu0 0.0
    %100 = vmatpush1.msra.mxu0 %v71
    %101 = vmatprep.subr.mxu0 0.0
    %102 = vmatpush1.msra.mxu0 %v34
    %103 = vmatprep.subr.mxu0 0.0
    %104 = vmatpush1.msra.mxu0 %v33
    %105 = vmatprep.subr.mxu0 0.0
    %106 = vmatpush2.msra.mxu0 0.0
    %107 = vmatprep.subr.mxu0 0.0
    %108 = vmatpush2.msra.mxu0 0.0
    %109 = vmatprep.subr.mxu0 0.0
    %110 = vmatpush2.msra.mxu0 0.0
    %111 = vmatprep.subr.mxu0 0.0
    %112 = vmatpush2.msra.mxu0 0.0
    %113 = vmatprep.subr.mxu0 0.0
    %114 = vmatpush2.msra.mxu0 0.0
    %115 = vmatprep.subr.mxu0 0.0
    %116 = vmatpush2.msra.mxu0 0.0
    %117 = vmatprep.subr.mxu0 0.0
    %118 = vmatpush2.msra.mxu0 0.0
    %119 = vmatprep.subr.mxu0 0.0
    %120 = vmatpush2.msra.mxu0 0.0
    %121 = vmatprep.subr.mxu0 0.0
    %122 = vmatpush2.msra.mxu0 0.0
    %123 = vmatprep.subr.mxu0 0.0
    %124 = vmatpush2.msra.mxu0 0.0
    %125 = vmatprep.subr.mxu0 0.0
    %126 = vmatpush2.msra.mxu0 0.0
    %127 = vmatprep.subr.mxu0 0.0
    %128 = vmatpush2.msra.mxu0 0.0
    %129 = vmatprep.subr.mxu0 0.0
    %130 = vmatpush2.msra.mxu0 0.0
    %131 = vmatprep.subr.mxu0 0.0
    %132 = vmatpush2.msra.mxu0 0.0
    %133 = vmatprep.subr.mxu0 0.0
    %134 = vmatpush2.msra.mxu0 0.0
    %135 = vmatprep.subr.mxu0 0.0
    %136 = vmatpush2.msra.mxu0 0.0
    %137 = vmatprep.mubr.f32.mxu0 0.0
    %138 = vmatmul.mubr.f32.gmra.mxu0 %v64
    %v139 = vpop.f32.mrf.mxu0
    %v140 = vadd.f32 0.0, %v139
    %v141 = vpop.f32.mrf.mxu0
    %142 = vmatprep.mubr.f32.mxu0 0.0
    %143 = vmatmul.mubr.f32.gmra.mxu0 %v67
    %v144 = vpop.f32.mrf.mxu0
    %v145 = vadd.f32 0.0, %v144
    %v146 = vpop.f32.mrf.mxu0
    %147 = vdwg.mxu0
    %vm148 = vcmask 261120
    %149 = vst.msk [vmem:[#allocation5] sm:$0xff] %vm148, %v29
    %150 = vst.msk [vmem:[#allocation5 + $0x8] sm:$0xff] %vm148, %v30
    %153 = vrot.lane.b32.xlu0 %v140, 32
    %v154 = vpop.permute.xlu0 %153
    %155 = vrot.lane.b32.xlu0 %v145, 32
    %v156 = vpop.permute.xlu0 %155
    %vm159 = vcmask 457984
    %160 = vst.msk [vmem:[#allocation5] sm:$0xff] %vm159, %v154
    %161 = vst.msk [vmem:[#allocation5 + $0x8] sm:$0xff] %vm159, %v156
    // Predicated region
    $region18: #{tpu_custom_call.1} parent=1 // pred_check
      _
    $region19: #{tpu_custom_call.1} parent=1 // pred_check_branch
      %163 = sbr.rel (0) target = $region21
    $region20: #{tpu_custom_call.1} parent=1 // pred_region
      %s165 = ssub.s32 256, 256
      %166 = vsyncadd [#allocation4], %s165
      %s167 = sshll.u32 [#allocation5], 4
      %s168 = int_to_ptr.vmem [resolvable:$true] %s167
      %173 = dma.vmem_to_hbm [thread:$0]  %s168, 256, %s3, [#allocation4], 128, 128, 8
    $region21: #{tpu_custom_call.1} parent=1 // pred_fallthru
      _
    // Predicated region
    $region22: #{tpu_custom_call.1} parent=1 // pred_check
      _
    $region23: #{tpu_custom_call.1} parent=1 // pred_check_branch
      %175 = sbr.rel (0) target = $region25
    $region24: #{tpu_custom_call.1} parent=1 // pred_region
      %176 = dma.done [#allocation4], 256
    $region25: #{tpu_custom_call.1} parent=1 // pred_fallthru
      _
    %177 = vsyncpa [#allocation3], 1
    %178 = vsyncpa [#allocation4], 1

</llo_original>
